<compile_context>
chip_gen: v5e
topology: v5e:2x2
jax: 0.10.0
libtpu: 0.0.40
codegen_flags: <defaults>
</compile_context>

<pallas_src>
import jax
import jax.numpy as jnp
from jax.experimental import pallas as pl
from jax.experimental.pallas import tpu as pltpu

EPS = 1e-5


def prenorm_linear_kernel(x_ref, w_ref, b_ref, o_ref):
    """LayerNorm(x_tile) @ W' + b' for one (TM, D) row tile.

    W'/b' carry the folded LayerNorm affine (gamma/beta), so the body is just
    centered statistics + normalize + one MXU matmul.
    """
    x = x_ref[...].astype(jnp.float32)
    d = x.shape[-1]
    inv_d = 1.0 / d
    # Two-pass (centered) statistics in f32: matches PyTorch nn.LayerNorm and
    # avoids the E[x^2]-E[x]^2 cancellation of the single-pass formula.
    mean = jnp.sum(x, axis=-1, keepdims=True) * inv_d
    xc = x - mean
    var = jnp.sum(xc * xc, axis=-1, keepdims=True) * inv_d
    xhat = xc * jax.lax.rsqrt(var + EPS)
    # Cast LHS to the (bf16) weight dtype so the MXU runs at full rate;
    # accumulate in f32.
    acc = jnp.dot(xhat.astype(w_ref.dtype), w_ref[...],
                  preferred_element_type=jnp.float32)
    o_ref[...] = (acc + b_ref[...].astype(jnp.float32)).astype(o_ref.dtype)


def fold_prenorm_linear_params(gamma, beta, w, wb, *, mxu_dtype=jnp.bfloat16):
    """Fold the LayerNorm affine into the Linear. Call ONCE at parameter load.

    (xhat * gamma + beta) @ W + wb == xhat @ (diag(gamma) @ W) + (beta @ W + wb)

    The folded weight is emitted in `mxu_dtype` (bf16 by default: full-rate MXU,
    half the weight DMA/VMEM); the folded bias stays f32.
    """
    gamma_f = gamma.astype(jnp.float32)
    beta_f = beta.astype(jnp.float32)
    w_f = w.astype(jnp.float32)
    w_folded = (gamma_f[:, None] * w_f).astype(mxu_dtype)
    b_folded = (beta_f @ w_f + wb.astype(jnp.float32)).reshape(1, -1)
    return w_folded, b_folded


def _vmem_capacity_bytes():
    try:
        return int(pltpu.get_tpu_info().vmem_capacity_bytes)
    except Exception:
        return 64 * 1024 * 1024  # conservative (v7x-sized) fallback


def prenorm_linear_folded(x, w_folded, b_folded, *, tile_rows=2048):
    """Fused LayerNorm + Linear on pre-folded parameters."""
    B, N, D = x.shape
    rows = B * N
    x2 = x.reshape(rows, D)
    out_dtype = x.dtype

    # ---- generation-aware VMEM budget (v5e/v6e: 128 MiB, v7x: 64 MiB) ----
    vmem_cap = _vmem_capacity_bytes()
    budget = int(vmem_cap * 0.75)  # ~96 MiB on 128 MiB parts, ~48 MiB on v7x

    w_bytes = w_folded.size * w_folded.dtype.itemsize
    b_bytes = b_folded.size * b_folded.dtype.itemsize
    # Counted as double-buffered even though we request Buffered(1) below, so
    # the fallback (default double-buffered) path also fits.
    const_bytes = 2 * (w_bytes + b_bytes)
    io_itemsize = x.dtype.itemsize + jnp.dtype(out_dtype).itemsize

    def step_bytes(t):
        io = 2 * t * D * io_itemsize      # double-buffered x + out tiles
        tmp = 4 * t * D * 4               # in-kernel f32 temporaries (x, xc, xhat, acc)
        return const_bytes + io + tmp

    # ---- row-tile sizing ----
    tm = min(tile_rows, rows)
    # Keep >= ~8 grid steps so each TensorCore on 2-TC parts (v7x) gets >= ~4
    # steps and the double-buffer pipeline stays filled.
    if rows // 8 >= 16:
        tm = min(tm, rows // 8)
    tm = max(16, (tm // 16) * 16)          # multiple of 16: bf16 sublane packing
    tm = min(tm, max(8, rows))
    while tm > 16 and step_bytes(tm) > budget:
        tm = max(16, ((tm // 2) // 16) * 16)

    # Always set the scoped VMEM limit explicitly: the default is only 16 MiB on
    # v5e (32 MiB on v6e/v7x), far below what large row tiles need.
    vmem_limit = int(min(vmem_cap - (2 << 20), step_bytes(tm) + (8 << 20)))
    vmem_limit = max(vmem_limit, 16 << 20)

    grid = (pl.cdiv(rows, tm),)

    def run(single_buffer_consts):
        const_kwargs = (
            dict(pipeline_mode=pl.Buffered(buffer_count=1))
            if single_buffer_consts else {}
        )
        return pl.pallas_call(
            prenorm_linear_kernel,
            out_shape=jax.ShapeDtypeStruct((rows, D), out_dtype),
            grid_spec=pltpu.PrefetchScalarGridSpec(
                num_scalar_prefetch=0,
                grid=grid,
                in_specs=[
                    pl.BlockSpec((tm, D), lambda i: (i, 0)),                  # x rows
                    pl.BlockSpec((D, D), lambda i: (0, 0), **const_kwargs),   # folded W
                    pl.BlockSpec((1, D), lambda i: (0, 0), **const_kwargs),   # folded bias
                ],
                out_specs=pl.BlockSpec((tm, D), lambda i: (i, 0)),
            ),
            compiler_params=pltpu.CompilerParams(
                dimension_semantics=("parallel",),   # rows shard across TCs on v7x
                vmem_limit_bytes=vmem_limit),
        )(x2, w_folded, b_folded)

    # Constant-index W/bias only need a single VMEM buffer; if this JAX build
    # rejects Buffered(1), fall back to default double buffering (still correct).
    try:
        out = run(True)
    except Exception:
        out = run(False)
    return out.reshape(B, N, D)


def prenorm_linear(x, gamma, beta, w, wb, *, tile_rows=2048,
                   mxu_dtype=jnp.bfloat16):
    """Convenience path. In production, fold once at parameter load and reuse
    prenorm_linear_folded per forward."""
    w_folded, b_folded = fold_prenorm_linear_params(
        gamma, beta, w, wb, mxu_dtype=mxu_dtype)
    return prenorm_linear_folded(x, w_folded, b_folded, tile_rows=tile_rows)


def prenorm_linear_ref(x, gamma, beta, w, wb):
    # Unfused reference: LayerNorm (PyTorch semantics) then Linear, all in f32.
    xf = x.astype(jnp.float32)
    mean = jnp.mean(xf, axis=-1, keepdims=True)
    var = jnp.mean((xf - mean) ** 2, axis=-1, keepdims=True)
    xhat = (xf - mean) * jax.lax.rsqrt(var + EPS)
    y = xhat * gamma.astype(jnp.float32) + beta.astype(jnp.float32)
    out = jnp.dot(y, w.astype(jnp.float32),
                  precision=jax.lax.Precision.HIGHEST) + wb.astype(jnp.float32)
    return out.astype(x.dtype)


if __name__ == "__main__":
    # Lane-dense channel dim (multiple of 128); rows = 512.
    B, N, D = 2, 256, 128
    key = jax.random.PRNGKey(0)
    kx, kg, kbe, kw, kb = jax.random.split(key, 5)

    x = jax.random.normal(kx, (B, N, D), dtype=jnp.float32)

    # Deterministic parameters. Non-trivial gamma/beta exercise the affine fold
    # (PyTorch default init would be gamma=1, beta=0).
    gamma = 1.0 + 0.1 * jax.random.normal(kg, (D,), dtype=jnp.float32)
    beta = 0.05 * jax.random.normal(kbe, (D,), dtype=jnp.float32)
    # Linear(dim, dim) weights (synthetic, deterministic).
    w = jax.random.normal(kw, (D, D), dtype=jnp.float32) * (1.0 / jnp.sqrt(D))
    wb = 0.01 * jax.random.normal(kb, (D,), dtype=jnp.float32)

    # Fold once (parameter-load time), then run the fused kernel.
    w_folded, b_folded = fold_prenorm_linear_params(gamma, beta, w, wb)
    out = prenorm_linear_folded(x, w_folded, b_folded)
    out = jax.block_until_ready(out)

    ref = prenorm_linear_ref(x, gamma, beta, w, wb)
    assert out.shape == (B, N, D)
    max_err = jnp.max(jnp.abs(out.astype(jnp.float32) - ref.astype(jnp.float32)))
    # Tolerance reflects bf16 folded weights / bf16 MXU LHS (f32 accumulation).
    assert jnp.allclose(out, ref, atol=5e-2, rtol=5e-2), (
        f"mismatch vs reference (max abs err {max_err})")

    print("KERNEL_OK")
</pallas_src>

<mosaic_0001>
module attributes {stable_mosaic.version = 11 : i64} {
  func.func @prenorm_linear_kernel(%arg0: i32, %arg1: memref<64x128xf32, #tpu.memory_space<vmem>>, %arg2: memref<128x128xbf16, #tpu.memory_space<vmem>>, %arg3: memref<1x128xf32, #tpu.memory_space<vmem>>, %arg4: memref<64x128xf32, #tpu.memory_space<vmem>>) attributes {dimension_semantics = [#tpu.dimension_semantics<parallel>], iteration_bounds = array<i64: 8>, scalar_prefetch = 0 : i64, scratch_operands = 0 : i64, tpu.core_type = #tpu.core_type<tc>, window_params = [{transform_indices = @transform_0, window_bounds = array<i64: 64, 128>}, {pipeline_mode = #tpu.pipeline_mode<synchronous>, transform_indices = @transform_1, window_bounds = array<i64: 128, 128>}, {pipeline_mode = #tpu.pipeline_mode<synchronous>, transform_indices = @transform_2, window_bounds = array<i64: 1, 128>}, {transform_indices = @transform_3, window_bounds = array<i64: 64, 128>}]} {
    %c0 = arith.constant 0 : index
    %c0_0 = arith.constant 0 : index
    %0 = vector.load %arg1[%c0, %c0_0] : memref<64x128xf32, #tpu.memory_space<vmem>>, vector<64x128xf32>
    %cst = arith.constant dense<0.000000e+00> : vector<64xf32>
    %1 = vector.multi_reduction <add>, %0, %cst [1] : vector<64x128xf32> to vector<64xf32>
    %2 = vector.shape_cast %1 : vector<64xf32> to vector<64x1xf32>
    %cst_1 = arith.constant 7.812500e-03 : f32
    %3 = vector.broadcast %cst_1 : f32 to vector<64x1xf32>
    %4 = arith.mulf %2, %3 : vector<64x1xf32>
    %5 = vector.broadcast %4 : vector<64x1xf32> to vector<64x128xf32>
    %6 = arith.subf %0, %5 : vector<64x128xf32>
    %7 = arith.mulf %6, %6 : vector<64x128xf32>
    %cst_2 = arith.constant dense<0.000000e+00> : vector<64xf32>
    %8 = vector.multi_reduction <add>, %7, %cst_2 [1] : vector<64x128xf32> to vector<64xf32>
    %9 = vector.shape_cast %8 : vector<64xf32> to vector<64x1xf32>
    %cst_3 = arith.constant 7.812500e-03 : f32
    %10 = vector.broadcast %cst_3 : f32 to vector<64x1xf32>
    %11 = arith.mulf %9, %10 : vector<64x1xf32>
    %cst_4 = arith.constant 9.99999974E-6 : f32
    %12 = vector.broadcast %cst_4 : f32 to vector<64x1xf32>
    %13 = arith.addf %11, %12 : vector<64x1xf32>
    %14 = math.rsqrt %13 : vector<64x1xf32>
    %15 = vector.broadcast %14 : vector<64x1xf32> to vector<64x128xf32>
    %16 = arith.mulf %6, %15 : vector<64x128xf32>
    %17 = arith.truncf %16 : vector<64x128xf32> to vector<64x128xbf16>
    %c0_5 = arith.constant 0 : index
    %c0_6 = arith.constant 0 : index
    %18 = vector.load %arg2[%c0_5, %c0_6] : memref<128x128xbf16, #tpu.memory_space<vmem>>, vector<128x128xbf16>
    %cst_7 = arith.constant dense<0.000000e+00> : vector<64x128xf32>
    %19 = tpu.matmul %17, %18, %cst_7 {dimension_numbers = #tpu.dot_dimension_numbers<[1], [0], [0], [1], [0, 0, 1, 1], [], []>} : vector<64x128xbf16>, vector<128x128xbf16>, vector<64x128xf32> -> vector<64x128xf32>
    %c0_8 = arith.constant 0 : index
    %c0_9 = arith.constant 0 : index
    %20 = vector.load %arg3[%c0_8, %c0_9] : memref<1x128xf32, #tpu.memory_space<vmem>>, vector<1x128xf32>
    %21 = vector.broadcast %20 : vector<1x128xf32> to vector<64x128xf32>
    %22 = arith.addf %19, %21 : vector<64x128xf32>
    %c0_10 = arith.constant 0 : index
    %c0_11 = arith.constant 0 : index
    %23 = vector.load %arg4[%c0_10, %c0_11] : memref<64x128xf32, #tpu.memory_space<vmem>>, vector<64x128xf32>
    tpu.vector_store %arg4[%c0_10, %c0_11], %22 {strides = array<i32>} : memref<64x128xf32, #tpu.memory_space<vmem>>, vector<64x128xf32>,
    return
  }
  func.func @transform_0(%arg0: i32) -> (i32, i32) {
    %c0_i32 = arith.constant 0 : i32
    %c0_i32_0 = arith.constant 0 : i32
    return %arg0, %c0_i32 : i32, i32
  }
  func.func @transform_1(%arg0: i32) -> (i32, i32) {
    %c0_i32 = arith.constant 0 : i32
    %c0_i32_0 = arith.constant 0 : i32
    %c0_i32_1 = arith.constant 0 : i32
    return %c0_i32, %c0_i32_0 : i32, i32
  }
  func.func @transform_2(%arg0: i32) -> (i32, i32) {
    %c0_i32 = arith.constant 0 : i32
    %c0_i32_0 = arith.constant 0 : i32
    %c0_i32_1 = arith.constant 0 : i32
    return %c0_i32, %c0_i32_0 : i32, i32
  }
  func.func @transform_3(%arg0: i32) -> (i32, i32) {
    %c0_i32 = arith.constant 0 : i32
    %c0_i32_0 = arith.constant 0 : i32
    return %arg0, %c0_i32 : i32, i32
  }
}

module attributes {stable_mosaic.version = 11 : i64} {
  func.func @prenorm_linear_kernel(%arg0: i32, %arg1: memref<64x128xf32, #tpu.memory_space<vmem>>, %arg2: memref<128x128xbf16, #tpu.memory_space<vmem>>, %arg3: memref<1x128xf32, #tpu.memory_space<vmem>>, %arg4: memref<64x128xf32, #tpu.memory_space<vmem>>) attributes {dimension_semantics = [#tpu.dimension_semantics<parallel>], iteration_bounds = array<i64: 8>, scalar_prefetch = 0 : i64, scratch_operands = 0 : i64, tpu.core_type = #tpu.core_type<tc>, window_params = [{transform_indices = @transform_0, window_bounds = array<i64: 64, 128>}, {pipeline_mode = #tpu.pipeline_mode<synchronous>, transform_indices = @transform_1, window_bounds = array<i64: 128, 128>}, {pipeline_mode = #tpu.pipeline_mode<synchronous>, transform_indices = @transform_2, window_bounds = array<i64: 1, 128>}, {transform_indices = @transform_3, window_bounds = array<i64: 64, 128>}]} {
    %c0 = arith.constant 0 : index
    %c0_0 = arith.constant 0 : index
    %0 = vector.load %arg1[%c0, %c0_0] : memref<64x128xf32, #tpu.memory_space<vmem>>, vector<64x128xf32>
    %cst = arith.constant dense<0.000000e+00> : vector<64xf32>
    %1 = vector.multi_reduction <add>, %0, %cst [1] : vector<64x128xf32> to vector<64xf32>
    %2 = vector.shape_cast %1 : vector<64xf32> to vector<64x1xf32>
    %cst_1 = arith.constant 7.812500e-03 : f32
    %3 = vector.broadcast %cst_1 : f32 to vector<64x1xf32>
    %4 = arith.mulf %2, %3 : vector<64x1xf32>
    %5 = vector.broadcast %4 : vector<64x1xf32> to vector<64x128xf32>
    %6 = arith.subf %0, %5 : vector<64x128xf32>
    %7 = arith.mulf %6, %6 : vector<64x128xf32>
    %cst_2 = arith.constant dense<0.000000e+00> : vector<64xf32>
    %8 = vector.multi_reduction <add>, %7, %cst_2 [1] : vector<64x128xf32> to vector<64xf32>
    %9 = vector.shape_cast %8 : vector<64xf32> to vector<64x1xf32>
    %cst_3 = arith.constant 7.812500e-03 : f32
    %10 = vector.broadcast %cst_3 : f32 to vector<64x1xf32>
    %11 = arith.mulf %9, %10 : vector<64x1xf32>
    %cst_4 = arith.constant 9.99999974E-6 : f32
    %12 = vector.broadcast %cst_4 : f32 to vector<64x1xf32>
    %13 = arith.addf %11, %12 : vector<64x1xf32>
    %14 = math.rsqrt %13 : vector<64x1xf32>
    %15 = vector.broadcast %14 : vector<64x1xf32> to vector<64x128xf32>
    %16 = arith.mulf %6, %15 : vector<64x128xf32>
    %17 = arith.truncf %16 : vector<64x128xf32> to vector<64x128xbf16>
    %c0_5 = arith.constant 0 : index
    %c0_6 = arith.constant 0 : index
    %18 = vector.load %arg2[%c0_5, %c0_6] : memref<128x128xbf16, #tpu.memory_space<vmem>>, vector<128x128xbf16>
    %cst_7 = arith.constant dense<0.000000e+00> : vector<64x128xf32>
    %19 = tpu.matmul %17, %18, %cst_7 {dimension_numbers = #tpu.dot_dimension_numbers<[1], [0], [0], [1], [0, 0, 1, 1], [], []>} : vector<64x128xbf16>, vector<128x128xbf16>, vector<64x128xf32> -> vector<64x128xf32>
    %c0_8 = arith.constant 0 : index
    %c0_9 = arith.constant 0 : index
    %20 = vector.load %arg3[%c0_8, %c0_9] : memref<1x128xf32, #tpu.memory_space<vmem>>, vector<1x128xf32>
    %21 = vector.broadcast %20 : vector<1x128xf32> to vector<64x128xf32>
    %22 = arith.addf %19, %21 : vector<64x128xf32>
    %c0_10 = arith.constant 0 : index
    %c0_11 = arith.constant 0 : index
    %23 = vector.load %arg4[%c0_10, %c0_11] : memref<64x128xf32, #tpu.memory_space<vmem>>, vector<64x128xf32>
    tpu.vector_store %arg4[%c0_10, %c0_11], %22 {strides = array<i32>} : memref<64x128xf32, #tpu.memory_space<vmem>>, vector<64x128xf32>,
    return
  }
  func.func @transform_0(%arg0: i32) -> (i32, i32) {
    %c0_i32 = arith.constant 0 : i32
    %c0_i32_0 = arith.constant 0 : i32
    return %arg0, %c0_i32 : i32, i32
  }
  func.func @transform_1(%arg0: i32) -> (i32, i32) {
    %c0_i32 = arith.constant 0 : i32
    %c0_i32_0 = arith.constant 0 : i32
    %c0_i32_1 = arith.constant 0 : i32
    return %c0_i32, %c0_i32_0 : i32, i32
  }
  func.func @transform_2(%arg0: i32) -> (i32, i32) {
    %c0_i32 = arith.constant 0 : i32
    %c0_i32_0 = arith.constant 0 : i32
    %c0_i32_1 = arith.constant 0 : i32
    return %c0_i32, %c0_i32_0 : i32, i32
  }
  func.func @transform_3(%arg0: i32) -> (i32, i32) {
    %c0_i32 = arith.constant 0 : i32
    %c0_i32_0 = arith.constant 0 : i32
    return %arg0, %c0_i32 : i32, i32
  }
}

</mosaic_0001>

<llo_original>
// kernel: tpu_custom_call.1
$region0: #{tpu_custom_call.1}
  #allocation0 [shape = 'u32[]', space=smem, size = 0x4, offset = 0x4, fixed_abs, tag = 'smem constant byte address 0x4 - core index']
  #allocation1 [shape = 'u32[72,128]{1,0:T(1,128)}', space=vmem, size = 0x9000, scoped, tag = 'internal scratch']
  %s0 = inlined_call_operand.hbm [shape: f32[512,128], index: 0, kind: input, shape index: {}]
  %s1 = inlined_call_operand.hbm [shape: bf16[128,128], index: 1, kind: input, shape index: {}]
  %s2 = inlined_call_operand.vmem [shape: f32[1,128], index: 2, kind: input, shape index: {}]
  %s3 = inlined_call_operand.hbm [shape: f32[512,128], index: 3, kind: output, shape index: {}]
  %s4 = sld [smem:[#allocation0]]
  $region53: #{tpu_custom_call.1} parent=0
    _
  %s6 = ssub.s32 1, %s4
  %s7 = scalar_select 0, %s6, %s4
  $region1: #{tpu_custom_call.1} parent=0
    #allocation2 [shape = 'u8[65536]{0}', space=vmem, size = 0x10000, scoped, tag = 'input window, operand 0']
    #allocation3 [shape = 's32[2]{0}', space=sflag, size = 0x8, scoped, tag = 'scoped memory for tpu_custom_call.1']
    #allocation4 [shape = 's32[2]{0}', space=sflag, size = 0x8, scoped, tag = 'scoped memory for tpu_custom_call.1']
    #allocation5 [shape = 'u8[32768]{0}', space=vmem, size = 0x8000, scoped, tag = 'input window, operand 1, single buffered']
    #allocation6 [shape = 's32[1]{0}', space=sflag, size = 0x4, scoped, tag = 'scoped memory for tpu_custom_call.1']
    #allocation7 [shape = 'u8[65536]{0}', space=vmem, size = 0x10000, scoped, tag = 'output window, operand 0']
    %8 = vsyncpa [#allocation3], 0
    %s9 = scalar_lea.sflag [#allocation3], 1
    %10 = vsyncpa %s9, 0
    %11 = vsyncpa [#allocation6], 0
    %12 = vsyncpa [#allocation4], 0
    %s13 = scalar_lea.sflag [#allocation4], 1
    %14 = vsyncpa %s13, 0
    loop: start=0, step=1, limit=10
    $region2: #{tpu_custom_call.1} parent=1 // loop_pre_header
      _
    $region3: #{tpu_custom_call.1} parent=1 // loop_header
      %s16 = sphi 0, %s20
      %p17 = scmp.ge.s32.totalorder %s16, 10
      %s26 = sphi 0, %s28
      %s29 = sphi 0, %s26
      %s30 = sphi 0, %s29
      %s46 = sphi 0, %s30
      %s50 = sphi 0, %s50
      %s52 = sphi 0, %s50
      %s53 = sphi 0, %s52
      %s67 = sphi 0, %s53
      %s71 = sphi 0, %s71
      %s73 = sphi 0, %s71
      %s74 = sphi 0, %s73
      %s88 = sphi 0, %s74
      %s94 = sphi 0, %s96
      %s97 = sphi 0, %s94
      %s98 = sphi 0, %s97
      %s114 = sphi 0, %s98
    $region4: #{tpu_custom_call.1} parent=1 // loop_header_branch
      %19 = sbr.rel (%p17) target = $region8
    $region5: #{tpu_custom_call.1} parent=1 // loop_body
      %s21 = ssub.s32 %s16, 1
      %s22 = ssub.s32 %s16, 2
      %s23 = sadd.s32 %s16, 1
      %s24 = ssub.s32 %s16, %s23
      %p25 = scmp.eq.s32.totalorder %s24, 0
      %s27 = sadd.s32 %s26, 1
      %s28 = scalar_select %p25, %s26, %s27
      %p31 = pneg %p25
      %p32 = scmp.eq.s32.totalorder %s16, 7
      %p33 = por %p31, %p32
      %p34 = scmp.ne.s32.totalorder %s26, %s29
      %p35 = scmp.eq.s32.totalorder %s16, 0
      %p36 = por %p34, %p35
      %p37 = scmp.ne.s32.totalorder %s26, %s29
      %p38 = scmp.eq.s32.totalorder %s21, 7
      %p39 = por %p37, %p38
      %p40 = scmp.ne.s32.totalorder %s29, %s30
      %p41 = scmp.eq.s32.totalorder %s21, 0
      %p42 = por %p40, %p41
      %p43 = scmp.ne.s32.totalorder %s29, %s30
      %p44 = scmp.eq.s32.totalorder %s22, 7
      %p45 = por %p43, %p44
      %p47 = scmp.ne.s32.totalorder %s30, %s46
      %p48 = scmp.eq.s32.totalorder %s22, 0
      %p49 = por %p47, %p48
      %s51 = sadd.s32 %s50, 1
      %p54 = scmp.eq.s32.totalorder %s16, 7
      %p55 = scmp.ne.s32.totalorder %s50, %s52
      %p56 = scmp.eq.s32.totalorder %s16, 0
      %p57 = por %p55, %p56
      %p58 = scmp.ne.s32.totalorder %s50, %s52
      %p59 = scmp.eq.s32.totalorder %s21, 7
      %p60 = por %p58, %p59
      %p61 = scmp.ne.s32.totalorder %s52, %s53
      %p62 = scmp.eq.s32.totalorder %s21, 0
      %p63 = por %p61, %p62
      %p64 = scmp.ne.s32.totalorder %s52, %s53
      %p65 = scmp.eq.s32.totalorder %s22, 7
      %p66 = por %p64, %p65
      %p68 = scmp.ne.s32.totalorder %s53, %s67
      %p69 = scmp.eq.s32.totalorder %s22, 0
      %p70 = por %p68, %p69
      %s72 = sadd.s32 %s71, 1
      %p75 = scmp.eq.s32.totalorder %s16, 7
      %p76 = scmp.ne.s32.totalorder %s71, %s73
      %p77 = scmp.eq.s32.totalorder %s16, 0
      %p78 = por %p76, %p77
      %p79 = scmp.ne.s32.totalorder %s71, %s73
      %p80 = scmp.eq.s32.totalorder %s21, 7
      %p81 = por %p79, %p80
      %p82 = scmp.ne.s32.totalorder %s73, %s74
      %p83 = scmp.eq.s32.totalorder %s21, 0
      %p84 = por %p82, %p83
      %p85 = scmp.ne.s32.totalorder %s73, %s74
      %p86 = scmp.eq.s32.totalorder %s22, 7
      %p87 = por %p85, %p86
      %p89 = scmp.ne.s32.totalorder %s74, %s88
      %p90 = scmp.eq.s32.totalorder %s22, 0
      %p91 = por %p89, %p90
      %s92 = ssub.s32 %s16, %s23
      %p93 = scmp.eq.s32.totalorder %s92, 0
      %s95 = sadd.s32 %s94, 1
      %s96 = scalar_select %p93, %s94, %s95
      %p99 = pneg %p93
      %p100 = scmp.eq.s32.totalorder %s16, 7
      %p101 = por %p99, %p100
      %p102 = scmp.ne.s32.totalorder %s94, %s97
      %p103 = scmp.eq.s32.totalorder %s16, 0
      %p104 = por %p102, %p103
      %p105 = scmp.ne.s32.totalorder %s94, %s97
      %p106 = scmp.eq.s32.totalorder %s21, 7
      %p107 = por %p105, %p106
      %p108 = scmp.ne.s32.totalorder %s97, %s98
      %p109 = scmp.eq.s32.totalorder %s21, 0
      %p110 = por %p108, %p109
      %p111 = scmp.ne.s32.totalorder %s97, %s98
      %p112 = scmp.eq.s32.totalorder %s22, 7
      %p113 = por %p111, %p112
      %p115 = scmp.ne.s32.totalorder %s98, %s114
      %p116 = scmp.eq.s32.totalorder %s22, 0
      %p117 = por %p115, %p116
      %p118 = scmp.le.s32.totalorder 1, %s16
      %p119 = scmp.lt.s32.totalorder %s16, 9
      %p120 = pnand %p118, %p119
      %p121 = pneg %p120
      // Predicated region
      $region9: #{tpu_custom_call.1} parent=5 // pred_check
        _
      $region10: #{tpu_custom_call.1} parent=5 // pred_check_branch
        %123 = sbr.rel (%p120) target = $region12
      $region11: #{tpu_custom_call.1} parent=5 // pred_region
        %s124 = ssub.s32 %s16, 1
        // Predicated region
        $region13: #{tpu_custom_call.1} parent=11 // pred_check
          %p125 = pneg %p63
        $region14: #{tpu_custom_call.1} parent=11 // pred_check_branch
          %127 = sbr.rel (%p125) target = $region16
        $region15: #{tpu_custom_call.1} parent=11 // pred_region
          %129 = vsyncadd [#allocation6], 0
          %s130 = sshll.u32 %s1, 4
          %s131 = int_to_ptr.hbm [resolvable:$true] %s130
          %s132 = sshll.u32 [#allocation5], 4
          %s133 = int_to_ptr.vmem [resolvable:$true] %s132
          %138 = dma.hbm_to_vmem [thread:$0]  %s131, 1024, %s133, [#allocation6], 64, 64, 4
        $region16: #{tpu_custom_call.1} parent=11 // pred_fallthru
          _
        // Predicated region
        $region17: #{tpu_custom_call.1} parent=11 // pred_check
          %p139 = pneg %p84
        $region18: #{tpu_custom_call.1} parent=11 // pred_check_branch
          %141 = sbr.rel (%p139) target = $region20
        $region19: #{tpu_custom_call.1} parent=11 // pred_region
          _
        $region20: #{tpu_custom_call.1} parent=11 // pred_fallthru
          _
      $region12: #{tpu_custom_call.1} parent=5 // pred_fallthru
        _
      %p142 = scmp.lt.s32.totalorder %s16, 8
      // Predicated region
      $region21: #{tpu_custom_call.1} parent=5 // pred_check
        %p143 = pneg %p142
      $region22: #{tpu_custom_call.1} parent=5 // pred_check_branch
        %145 = sbr.rel (%p143) target = $region24
      $region23: #{tpu_custom_call.1} parent=5 // pred_region
        // Predicated region
        $region25: #{tpu_custom_call.1} parent=23 // pred_check
          %p146 = pneg %p36
        $region26: #{tpu_custom_call.1} parent=23 // pred_check_branch
          %148 = sbr.rel (%p146) target = $region28
        $region27: #{tpu_custom_call.1} parent=23 // pred_region
          %s149 = sand.u32 %s26, 1
          %s150 = scalar_lea.sflag [#allocation3], %s149
          %s151 = sand.u32 %s26, 1
          %s152 = smul.addr %s151, 64
          %s153 = scalar_lea.vmem [#allocation2], %s152
          %s154 = smul.u32 8, %s16
          %156 = vsyncadd %s150, 0
          %s157 = smul.addr %s154, 8
          %s158 = scalar_lea.hbm %s0, %s157
          %s159 = sshll.u32 %s158, 4
          %s160 = int_to_ptr.hbm [resolvable:$true] %s159
          %s161 = sshll.u32 %s153, 4
          %s162 = int_to_ptr.vmem [resolvable:$true] %s161
          %167 = dma.hbm_to_vmem [thread:$0]  %s160, 1024, %s162, %s150, 128, 128, 8
        $region28: #{tpu_custom_call.1} parent=23 // pred_fallthru
          _
      $region24: #{tpu_custom_call.1} parent=5 // pred_fallthru
        _
      %p168 = scmp.le.s32.totalorder 1, %s16
      %p169 = scmp.lt.s32.totalorder %s16, 9
      %p170 = pnand %p168, %p169
      %p171 = pneg %p170
      // Predicated region
      $region29: #{tpu_custom_call.1} parent=5 // pred_check
        _
      $region30: #{tpu_custom_call.1} parent=5 // pred_check_branch
        %173 = sbr.rel (%p170) target = $region32
      $region31: #{tpu_custom_call.1} parent=5 // pred_region
        %s174 = ssub.s32 %s16, 1
        %s175 = sand.u32 %s29, 1
        %s176 = scalar_lea.sflag [#allocation3], %s175
        %s177 = sand.u32 %s29, 1
        %s178 = smul.addr %s177, 64
        %s179 = scalar_lea.vmem [#allocation2], %s178
        // Predicated region
        $region33: #{tpu_custom_call.1} parent=31 // pred_check
          %p180 = pneg %p42
        $region34: #{tpu_custom_call.1} parent=31 // pred_check_branch
          %182 = sbr.rel (%p180) target = $region36
        $region35: #{tpu_custom_call.1} parent=31 // pred_region
          %184 = dma.done %s176, 1024
        $region36: #{tpu_custom_call.1} parent=31 // pred_fallthru
          _
        // Predicated region
        $region37: #{tpu_custom_call.1} parent=31 // pred_check
          %p185 = pneg %p63
        $region38: #{tpu_custom_call.1} parent=31 // pred_check_branch
          %187 = sbr.rel (%p185) target = $region40
        $region39: #{tpu_custom_call.1} parent=31 // pred_region
          %189 = dma.done [#allocation6], 1024
        $region40: #{tpu_custom_call.1} parent=31 // pred_fallthru
          _
        %s190 = sand.u32 %s29, 1
        %s191 = scalar_lea.sflag [#allocation3], %s190
        %s192 = sand.u32 %s29, 1
        %s193 = smul.addr %s192, 64
        %s194 = scalar_lea.vmem [#allocation2], %s193
        %p195 = pneg %p42
        %p196 = pneg %p39
        %p197 = pneg %p63
        %p198 = pneg %p60
        %p199 = pneg %p84
        %p200 = pneg %p81
        %p201 = pneg %p110
        %p202 = pneg %p107
        %s203 = sand.u32 %s97, 1
        %s204 = scalar_lea.sflag [#allocation4], %s203
        %s205 = sand.u32 %s97, 1
        %s206 = smul.addr %s205, 64
        %s207 = scalar_lea.vmem [#allocation7], %s206
        %s208 = smul.u32 8, %s21
        %s209 = smul.u32 8, %s21
        %v210 = vld [vmem:[%s179] sm:$0xff]
        %v211 = vld [vmem:[%s179 + $0x8] sm:$0xff]
        %v212 = vld [vmem:[%s179 + $0x10] sm:$0xff]
        %v213 = vld [vmem:[%s179 + $0x18] sm:$0xff]
        %v214 = vld [vmem:[%s179 + $0x20] sm:$0xff]
        %v215 = vld [vmem:[%s179 + $0x28] sm:$0xff]
        %v216 = vld [vmem:[%s179 + $0x30] sm:$0xff]
        %v217 = vld [vmem:[%s179 + $0x38] sm:$0xff]
        %218 = vadd.xlane.f32.xlu0 %v210
        %v219 = vpop.xlane.xlu0 %218
        %220 = vadd.xlane.f32.xlu0 %v211
        %v221 = vpop.xlane.xlu0 %220
        %222 = vadd.xlane.f32.xlu0 %v212
        %v223 = vpop.xlane.xlu0 %222
        %224 = vadd.xlane.f32.xlu0 %v213
        %v225 = vpop.xlane.xlu0 %224
        %226 = vadd.xlane.f32.xlu0 %v214
        %v227 = vpop.xlane.xlu0 %226
        %228 = vadd.xlane.f32.xlu0 %v215
        %v229 = vpop.xlane.xlu0 %228
        %230 = vadd.xlane.f32.xlu0 %v216
        %v231 = vpop.xlane.xlu0 %230
        %232 = vadd.xlane.f32.xlu0 %v217
        %v233 = vpop.xlane.xlu0 %232
        %v234 = vmul.f32 %v219, 0.0078125
        %v235 = vmul.f32 %v221, 0.0078125
        %v236 = vmul.f32 %v223, 0.0078125
        %v237 = vmul.f32 %v225, 0.0078125
        %v238 = vmul.f32 %v227, 0.0078125
        %v239 = vmul.f32 %v229, 0.0078125
        %v240 = vmul.f32 %v231, 0.0078125
        %v241 = vmul.f32 %v233, 0.0078125
        %v242 = vsub.f32 %v210, %v234
        %v243 = vsub.f32 %v211, %v235
        %v244 = vsub.f32 %v212, %v236
        %v245 = vsub.f32 %v213, %v237
        %v246 = vsub.f32 %v214, %v238
        %v247 = vsub.f32 %v215, %v239
        %v248 = vsub.f32 %v216, %v240
        %v249 = vsub.f32 %v217, %v241
        %v250 = vmul.f32 %v242, %v242
        %v251 = vmul.f32 %v243, %v243
        %v252 = vmul.f32 %v244, %v244
        %v253 = vmul.f32 %v245, %v245
        %v254 = vmul.f32 %v246, %v246
        %v255 = vmul.f32 %v247, %v247
        %v256 = vmul.f32 %v248, %v248
        %v257 = vmul.f32 %v249, %v249
        %258 = vadd.xlane.f32.xlu0 %v250
        %v259 = vpop.xlane.xlu0 %258
        %260 = vadd.xlane.f32.xlu0 %v251
        %v261 = vpop.xlane.xlu0 %260
        %262 = vadd.xlane.f32.xlu0 %v252
        %v263 = vpop.xlane.xlu0 %262
        %264 = vadd.xlane.f32.xlu0 %v253
        %v265 = vpop.xlane.xlu0 %264
        %266 = vadd.xlane.f32.xlu0 %v254
        %v267 = vpop.xlane.xlu0 %266
        %268 = vadd.xlane.f32.xlu0 %v255
        %v269 = vpop.xlane.xlu0 %268
        %270 = vadd.xlane.f32.xlu0 %v256
        %v271 = vpop.xlane.xlu0 %270
        %272 = vadd.xlane.f32.xlu0 %v257
        %v273 = vpop.xlane.xlu0 %272
        %v274 = vmul.f32 %v259, 0.0078125
        %v275 = vmul.f32 %v261, 0.0078125
        %v276 = vmul.f32 %v263, 0.0078125
        %v277 = vmul.f32 %v265, 0.0078125
        %v278 = vmul.f32 %v267, 0.0078125
        %v279 = vmul.f32 %v269, 0.0078125
        %v280 = vmul.f32 %v271, 0.0078125
        %v281 = vmul.f32 %v273, 0.0078125
        %v282 = vadd.f32 %v274, 1e-05
        %v283 = vadd.f32 %v275, 1e-05
        %v284 = vadd.f32 %v276, 1e-05
        %v285 = vadd.f32 %v277, 1e-05
        %v286 = vadd.f32 %v278, 1e-05
        %v287 = vadd.f32 %v279, 1e-05
        %v288 = vadd.f32 %v280, 1e-05
        %v289 = vadd.f32 %v281, 1e-05
        %v290 = vrsqrt.pop %v282
        %v291 = vmul.f32 %v290, %v282
        %v292 = vmul.f32 %v291, %v290
        %v293 = vmul.f32 0.5, %v292
        %v294 = vsub.f32 1.5, %v293
        %v295 = vmul.f32 %v290, %v294
        %vm296 = vweird.f32 %v282
        %vm297 = vweird.f32 %v290
        %vm298 = vmor %vm296, %vm297
        %v299 = vsel %vm298, %v290, %v295
        %v300 = vrsqrt.pop %v283
        %v301 = vmul.f32 %v300, %v283
        %v302 = vmul.f32 %v301, %v300
        %v303 = vmul.f32 0.5, %v302
        %v304 = vsub.f32 1.5, %v303
        %v305 = vmul.f32 %v300, %v304
        %vm306 = vweird.f32 %v283
        %vm307 = vweird.f32 %v300
        %vm308 = vmor %vm306, %vm307
        %v309 = vsel %vm308, %v300, %v305
        %v310 = vrsqrt.pop %v284
        %v311 = vmul.f32 %v310, %v284
        %v312 = vmul.f32 %v311, %v310
        %v313 = vmul.f32 0.5, %v312
        %v314 = vsub.f32 1.5, %v313
        %v315 = vmul.f32 %v310, %v314
        %vm316 = vweird.f32 %v284
        %vm317 = vweird.f32 %v310
        %vm318 = vmor %vm316, %vm317
        %v319 = vsel %vm318, %v310, %v315
        %v320 = vrsqrt.pop %v285
        %v321 = vmul.f32 %v320, %v285
        %v322 = vmul.f32 %v321, %v320
        %v323 = vmul.f32 0.5, %v322
        %v324 = vsub.f32 1.5, %v323
        %v325 = vmul.f32 %v320, %v324
        %vm326 = vweird.f32 %v285
        %vm327 = vweird.f32 %v320
        %vm328 = vmor %vm326, %vm327
        %v329 = vsel %vm328, %v320, %v325
        %v330 = vrsqrt.pop %v286
        %v331 = vmul.f32 %v330, %v286
        %v332 = vmul.f32 %v331, %v330
        %v333 = vmul.f32 0.5, %v332
        %v334 = vsub.f32 1.5, %v333
        %v335 = vmul.f32 %v330, %v334
        %vm336 = vweird.f32 %v286
        %vm337 = vweird.f32 %v330
        %vm338 = vmor %vm336, %vm337
        %v339 = vsel %vm338, %v330, %v335
        %v340 = vrsqrt.pop %v287
        %v341 = vmul.f32 %v340, %v287
        %v342 = vmul.f32 %v341, %v340
        %v343 = vmul.f32 0.5, %v342
        %v344 = vsub.f32 1.5, %v343
        %v345 = vmul.f32 %v340, %v344
        %vm346 = vweird.f32 %v287
        %vm347 = vweird.f32 %v340
        %vm348 = vmor %vm346, %vm347
        %v349 = vsel %vm348, %v340, %v345
        %v350 = vrsqrt.pop %v288
        %v351 = vmul.f32 %v350, %v288
        %v352 = vmul.f32 %v351, %v350
        %v353 = vmul.f32 0.5, %v352
        %v354 = vsub.f32 1.5, %v353
        %v355 = vmul.f32 %v350, %v354
        %vm356 = vweird.f32 %v288
        %vm357 = vweird.f32 %v350
        %vm358 = vmor %vm356, %vm357
        %v359 = vsel %vm358, %v350, %v355
        %v360 = vrsqrt.pop %v289
        %v361 = vmul.f32 %v360, %v289
        %v362 = vmul.f32 %v361, %v360
        %v363 = vmul.f32 0.5, %v362
        %v364 = vsub.f32 1.5, %v363
        %v365 = vmul.f32 %v360, %v364
        %vm366 = vweird.f32 %v289
        %vm367 = vweird.f32 %v360
        %vm368 = vmor %vm366, %vm367
        %v369 = vsel %vm368, %v360, %v365
        %v370 = vmul.f32 %v242, %v299
        %v371 = vmul.f32 %v243, %v309
        %v372 = vmul.f32 %v244, %v319
        %v373 = vmul.f32 %v245, %v329
        %v374 = vmul.f32 %v246, %v339
        %v375 = vmul.f32 %v247, %v349
        %v376 = vmul.f32 %v248, %v359
        %v377 = vmul.f32 %v249, %v369
        %v378 = vpack.c.bf16 %v371, %v370
        %v379 = vpack.c.bf16 %v373, %v372
        %v380 = vpack.c.bf16 %v375, %v374
        %v381 = vpack.c.bf16 %v377, %v376
        %v382 = vld [vmem:[#allocation5] sm:$0xf]
        %v383 = vld [vmem:[#allocation5 + $0x4] sm:$0xf]
        %v384 = vld [vmem:[#allocation5 + $0x8] sm:$0xf]
        %v385 = vld [vmem:[#allocation5 + $0xc] sm:$0xf]
        %v386 = vld [vmem:[#allocation5 + $0x10] sm:$0xf]
        %v387 = vld [vmem:[#allocation5 + $0x14] sm:$0xf]
        %v388 = vld [vmem:[#allocation5 + $0x18] sm:$0xf]
        %v389 = vld [vmem:[#allocation5 + $0x1c] sm:$0xf]
        %v390 = vld [vmem:[#allocation5 + $0x20] sm:$0xf]
        %v391 = vld [vmem:[#allocation5 + $0x24] sm:$0xf]
        %v392 = vld [vmem:[#allocation5 + $0x28] sm:$0xf]
        %v393 = vld [vmem:[#allocation5 + $0x2c] sm:$0xf]
        %v394 = vld [vmem:[#allocation5 + $0x30] sm:$0xf]
        %v395 = vld [vmem:[#allocation5 + $0x34] sm:$0xf]
        %v396 = vld [vmem:[#allocation5 + $0x38] sm:$0xf]
        %v397 = vld [vmem:[#allocation5 + $0x3c] sm:$0xf]
        %v398 = vld [vmem:[%s2] sm:$0x1]
        %v400 = vperm.slane %v398, 0
        %v418 = vunpack.c.l.b16 %v382
        %v419 = vunpack.c.l.b16 %v383
        %v420 = vunpack.c.l.b16 %v384
        %v421 = vunpack.c.l.b16 %v385
        %v422 = vunpack.c.l.b16 %v386
        %v423 = vunpack.c.l.b16 %v387
        %v424 = vunpack.c.l.b16 %v388
        %v425 = vunpack.c.l.b16 %v389
        %v426 = vunpack.c.l.b16 %v390
        %v427 = vunpack.c.l.b16 %v391
        %v428 = vunpack.c.l.b16 %v392
        %v429 = vunpack.c.l.b16 %v393
        %v430 = vunpack.c.l.b16 %v394
        %v431 = vunpack.c.l.b16 %v395
        %v432 = vunpack.c.l.b16 %v396
        %v433 = vunpack.c.l.b16 %v397
        %v434 = vpack.c.b16 %v419, %v418
        %v435 = vpack.c.b16 %v421, %v420
        %v436 = vpack.c.b16 %v423, %v422
        %v437 = vpack.c.b16 %v425, %v424
        %v438 = vpack.c.b16 %v427, %v426
        %v439 = vpack.c.b16 %v429, %v428
        %v440 = vpack.c.b16 %v431, %v430
        %v441 = vpack.c.b16 %v433, %v432
        %450 = vmatpush.bf16.msra.mxu0 %v441
        %451 = vmatpush.bf16.msra.mxu0 %v440
        %452 = vmatpush.bf16.msra.mxu0 %v439
        %453 = vmatpush.bf16.msra.mxu0 %v438
        %454 = vmatpush.bf16.msra.mxu0 %v437
        %455 = vmatpush.bf16.msra.mxu0 %v436
        %456 = vmatpush.bf16.msra.mxu0 %v435
        %457 = vmatpush.bf16.msra.mxu0 %v434
        %458 = vmatmul.bf16.gmra.mxu0 %v378
        %v459 = vpop.f32.mrf.mxu0
        %v460 = vadd.f32 %v400, %v459
        %v461 = vpop.f32.mrf.mxu0
        %v462 = vadd.f32 %v400, %v461
        %463 = vmatmul.bf16.gmra.mxu0 %v379
        %v464 = vpop.f32.mrf.mxu0
        %v465 = vadd.f32 %v400, %v464
        %v466 = vpop.f32.mrf.mxu0
        %v467 = vadd.f32 %v400, %v466
        %468 = vmatmul.bf16.gmra.mxu0 %v380
        %v469 = vpop.f32.mrf.mxu0
        %v470 = vadd.f32 %v400, %v469
        %v471 = vpop.f32.mrf.mxu0
        %v472 = vadd.f32 %v400, %v471
        %473 = vmatmul.bf16.gmra.mxu0 %v381
        %v474 = vpop.f32.mrf.mxu0
        %v475 = vadd.f32 %v400, %v474
        %v476 = vpop.f32.mrf.mxu0
        %v477 = vadd.f32 %v400, %v476
        %478 = vdwg.mxu0
        %479 = vst [vmem:[%s207] sm:$0xff] %v460
        %480 = vst [vmem:[%s207 + $0x8] sm:$0xff] %v462
        %481 = vst [vmem:[%s207 + $0x10] sm:$0xff] %v465
        %482 = vst [vmem:[%s207 + $0x18] sm:$0xff] %v467
        %483 = vst [vmem:[%s207 + $0x20] sm:$0xff] %v470
        %484 = vst [vmem:[%s207 + $0x28] sm:$0xff] %v472
        %485 = vst [vmem:[%s207 + $0x30] sm:$0xff] %v475
        %486 = vst [vmem:[%s207 + $0x38] sm:$0xff] %v477
        %s487 = sand.u32 %s97, 1
        %s488 = scalar_lea.sflag [#allocation4], %s487
        %s489 = sand.u32 %s97, 1
        %s490 = smul.addr %s489, 64
        %s491 = scalar_lea.vmem [#allocation7], %s490
        // Predicated region
        $region41: #{tpu_custom_call.1} parent=31 // pred_check
          %p492 = pneg %p107
        $region42: #{tpu_custom_call.1} parent=31 // pred_check_branch
          %494 = sbr.rel (%p492) target = $region44
        $region43: #{tpu_custom_call.1} parent=31 // pred_region
          %s495 = smul.u32 8, %s21
          %497 = vsyncadd %s488, 0
          %s498 = smul.addr %s495, 8
          %s499 = scalar_lea.hbm %s3, %s498
          %s500 = sshll.u32 %s491, 4
          %s501 = int_to_ptr.vmem [resolvable:$true] %s500
          %s502 = sshll.u32 %s499, 4
          %s503 = int_to_ptr.hbm [resolvable:$true] %s502
          %508 = dma.vmem_to_hbm [thread:$0]  %s501, 1024, %s503, %s488, 128, 128, 8
        $region44: #{tpu_custom_call.1} parent=31 // pred_fallthru
          _
      $region32: #{tpu_custom_call.1} parent=5 // pred_fallthru
        _
      %p509 = scmp.le.s32.totalorder 2, %s16
      // Predicated region
      $region45: #{tpu_custom_call.1} parent=5 // pred_check
        %p510 = pneg %p509
      $region46: #{tpu_custom_call.1} parent=5 // pred_check_branch
        %512 = sbr.rel (%p510) target = $region48
      $region47: #{tpu_custom_call.1} parent=5 // pred_region
        %s513 = ssub.s32 %s16, 2
        // Predicated region
        $region49: #{tpu_custom_call.1} parent=47 // pred_check
          %p514 = pneg %p113
        $region50: #{tpu_custom_call.1} parent=47 // pred_check_branch
          %516 = sbr.rel (%p514) target = $region52
        $region51: #{tpu_custom_call.1} parent=47 // pred_region
          %s517 = sand.u32 %s98, 1
          %s518 = scalar_lea.sflag [#allocation4], %s517
          %s519 = sand.u32 %s98, 1
          %s520 = smul.addr %s519, 64
          %s521 = scalar_lea.vmem [#allocation7], %s520
          %523 = dma.done %s518, 1024
        $region52: #{tpu_custom_call.1} parent=47 // pred_fallthru
          _
      $region48: #{tpu_custom_call.1} parent=5 // pred_fallthru
        _
    $region6: #{tpu_custom_call.1} parent=1 // loop_footer
      %s20 = sadd.s32 1, %s16
    $region7: #{tpu_custom_call.1} parent=1 // loop_footer_branch
      %15 = sbr.rel target = $region3
    $region8: #{tpu_custom_call.1} parent=1 // loop_exit
      _
    %524 = vsyncpa [#allocation3], 1
    %s525 = scalar_lea.sflag [#allocation3], 1
    %526 = vsyncpa %s525, 1
    %527 = vsyncpa [#allocation6], 1
    %528 = vsyncpa [#allocation4], 1
    %s529 = scalar_lea.sflag [#allocation4], 1
    %530 = vsyncpa %s529, 1

// kernel: tpu_custom_call.1
$region0: #{tpu_custom_call.1}
  #allocation0 [shape = 'u32[]', space=smem, size = 0x4, offset = 0x4, fixed_abs, tag = 'smem constant byte address 0x4 - core index']
  #allocation1 [shape = 'u32[72,128]{1,0:T(1,128)}', space=vmem, size = 0x9000, scoped, tag = 'internal scratch']
  %s0 = inlined_call_operand.hbm [shape: f32[512,128], index: 0, kind: input, shape index: {}]
  %s1 = inlined_call_operand.hbm [shape: bf16[128,128], index: 1, kind: input, shape index: {}]
  %s2 = inlined_call_operand.vmem [shape: f32[1,128], index: 2, kind: input, shape index: {}]
  %s3 = inlined_call_operand.hbm [shape: f32[512,128], index: 3, kind: output, shape index: {}]
  %s4 = sld [smem:[#allocation0]]
  $region53: #{tpu_custom_call.1} parent=0
    _
  %s6 = ssub.s32 1, %s4
  %s7 = scalar_select 0, %s6, %s4
  $region1: #{tpu_custom_call.1} parent=0
    #allocation2 [shape = 'u8[65536]{0}', space=vmem, size = 0x10000, scoped, tag = 'input window, operand 0']
    #allocation3 [shape = 's32[2]{0}', space=sflag, size = 0x8, scoped, tag = 'scoped memory for tpu_custom_call.1']
    #allocation4 [shape = 's32[2]{0}', space=sflag, size = 0x8, scoped, tag = 'scoped memory for tpu_custom_call.1']
    #allocation5 [shape = 'u8[32768]{0}', space=vmem, size = 0x8000, scoped, tag = 'input window, operand 1, single buffered']
    #allocation6 [shape = 's32[1]{0}', space=sflag, size = 0x4, scoped, tag = 'scoped memory for tpu_custom_call.1']
    #allocation7 [shape = 'u8[65536]{0}', space=vmem, size = 0x10000, scoped, tag = 'output window, operand 0']
    %8 = vsyncpa [#allocation3], 0
    %s9 = scalar_lea.sflag [#allocation3], 1
    %10 = vsyncpa %s9, 0
    %11 = vsyncpa [#allocation6], 0
    %12 = vsyncpa [#allocation4], 0
    %s13 = scalar_lea.sflag [#allocation4], 1
    %14 = vsyncpa %s13, 0
    loop: start=0, step=1, limit=10
    $region2: #{tpu_custom_call.1} parent=1 // loop_pre_header
      _
    $region3: #{tpu_custom_call.1} parent=1 // loop_header
      %s16 = sphi 0, %s20
      %p17 = scmp.ge.s32.totalorder %s16, 10
      %s26 = sphi 0, %s28
      %s29 = sphi 0, %s26
      %s30 = sphi 0, %s29
      %s46 = sphi 0, %s30
      %s50 = sphi 0, %s50
      %s52 = sphi 0, %s50
      %s53 = sphi 0, %s52
      %s67 = sphi 0, %s53
      %s71 = sphi 0, %s71
      %s73 = sphi 0, %s71
      %s74 = sphi 0, %s73
      %s88 = sphi 0, %s74
      %s94 = sphi 0, %s96
      %s97 = sphi 0, %s94
      %s98 = sphi 0, %s97
      %s114 = sphi 0, %s98
    $region4: #{tpu_custom_call.1} parent=1 // loop_header_branch
      %19 = sbr.rel (%p17) target = $region8
    $region5: #{tpu_custom_call.1} parent=1 // loop_body
      %s21 = ssub.s32 %s16, 1
      %s22 = ssub.s32 %s16, 2
      %s23 = sadd.s32 %s16, 1
      %s24 = ssub.s32 %s16, %s23
      %p25 = scmp.eq.s32.totalorder %s24, 0
      %s27 = sadd.s32 %s26, 1
      %s28 = scalar_select %p25, %s26, %s27
      %p31 = pneg %p25
      %p32 = scmp.eq.s32.totalorder %s16, 7
      %p33 = por %p31, %p32
      %p34 = scmp.ne.s32.totalorder %s26, %s29
      %p35 = scmp.eq.s32.totalorder %s16, 0
      %p36 = por %p34, %p35
      %p37 = scmp.ne.s32.totalorder %s26, %s29
      %p38 = scmp.eq.s32.totalorder %s21, 7
      %p39 = por %p37, %p38
      %p40 = scmp.ne.s32.totalorder %s29, %s30
      %p41 = scmp.eq.s32.totalorder %s21, 0
      %p42 = por %p40, %p41
      %p43 = scmp.ne.s32.totalorder %s29, %s30
      %p44 = scmp.eq.s32.totalorder %s22, 7
      %p45 = por %p43, %p44
      %p47 = scmp.ne.s32.totalorder %s30, %s46
      %p48 = scmp.eq.s32.totalorder %s22, 0
      %p49 = por %p47, %p48
      %s51 = sadd.s32 %s50, 1
      %p54 = scmp.eq.s32.totalorder %s16, 7
      %p55 = scmp.ne.s32.totalorder %s50, %s52
      %p56 = scmp.eq.s32.totalorder %s16, 0
      %p57 = por %p55, %p56
      %p58 = scmp.ne.s32.totalorder %s50, %s52
      %p59 = scmp.eq.s32.totalorder %s21, 7
      %p60 = por %p58, %p59
      %p61 = scmp.ne.s32.totalorder %s52, %s53
      %p62 = scmp.eq.s32.totalorder %s21, 0
      %p63 = por %p61, %p62
      %p64 = scmp.ne.s32.totalorder %s52, %s53
      %p65 = scmp.eq.s32.totalorder %s22, 7
      %p66 = por %p64, %p65
      %p68 = scmp.ne.s32.totalorder %s53, %s67
      %p69 = scmp.eq.s32.totalorder %s22, 0
      %p70 = por %p68, %p69
      %s72 = sadd.s32 %s71, 1
      %p75 = scmp.eq.s32.totalorder %s16, 7
      %p76 = scmp.ne.s32.totalorder %s71, %s73
      %p77 = scmp.eq.s32.totalorder %s16, 0
      %p78 = por %p76, %p77
      %p79 = scmp.ne.s32.totalorder %s71, %s73
      %p80 = scmp.eq.s32.totalorder %s21, 7
      %p81 = por %p79, %p80
      %p82 = scmp.ne.s32.totalorder %s73, %s74
      %p83 = scmp.eq.s32.totalorder %s21, 0
      %p84 = por %p82, %p83
      %p85 = scmp.ne.s32.totalorder %s73, %s74
      %p86 = scmp.eq.s32.totalorder %s22, 7
      %p87 = por %p85, %p86
      %p89 = scmp.ne.s32.totalorder %s74, %s88
      %p90 = scmp.eq.s32.totalorder %s22, 0
      %p91 = por %p89, %p90
      %s92 = ssub.s32 %s16, %s23
      %p93 = scmp.eq.s32.totalorder %s92, 0
      %s95 = sadd.s32 %s94, 1
      %s96 = scalar_select %p93, %s94, %s95
      %p99 = pneg %p93
      %p100 = scmp.eq.s32.totalorder %s16, 7
      %p101 = por %p99, %p100
      %p102 = scmp.ne.s32.totalorder %s94, %s97
      %p103 = scmp.eq.s32.totalorder %s16, 0
      %p104 = por %p102, %p103
      %p105 = scmp.ne.s32.totalorder %s94, %s97
      %p106 = scmp.eq.s32.totalorder %s21, 7
      %p107 = por %p105, %p106
      %p108 = scmp.ne.s32.totalorder %s97, %s98
      %p109 = scmp.eq.s32.totalorder %s21, 0
      %p110 = por %p108, %p109
      %p111 = scmp.ne.s32.totalorder %s97, %s98
      %p112 = scmp.eq.s32.totalorder %s22, 7
      %p113 = por %p111, %p112
      %p115 = scmp.ne.s32.totalorder %s98, %s114
      %p116 = scmp.eq.s32.totalorder %s22, 0
      %p117 = por %p115, %p116
      %p118 = scmp.le.s32.totalorder 1, %s16
      %p119 = scmp.lt.s32.totalorder %s16, 9
      %p120 = pnand %p118, %p119
      %p121 = pneg %p120
      // Predicated region
      $region9: #{tpu_custom_call.1} parent=5 // pred_check
        _
      $region10: #{tpu_custom_call.1} parent=5 // pred_check_branch
        %123 = sbr.rel (%p120) target = $region12
      $region11: #{tpu_custom_call.1} parent=5 // pred_region
        %s124 = ssub.s32 %s16, 1
        // Predicated region
        $region13: #{tpu_custom_call.1} parent=11 // pred_check
          %p125 = pneg %p63
        $region14: #{tpu_custom_call.1} parent=11 // pred_check_branch
          %127 = sbr.rel (%p125) target = $region16
        $region15: #{tpu_custom_call.1} parent=11 // pred_region
          %129 = vsyncadd [#allocation6], 0
          %s130 = sshll.u32 %s1, 4
          %s131 = int_to_ptr.hbm [resolvable:$true] %s130
          %s132 = sshll.u32 [#allocation5], 4
          %s133 = int_to_ptr.vmem [resolvable:$true] %s132
          %138 = dma.hbm_to_vmem [thread:$0]  %s131, 1024, %s133, [#allocation6], 64, 64, 4
        $region16: #{tpu_custom_call.1} parent=11 // pred_fallthru
          _
        // Predicated region
        $region17: #{tpu_custom_call.1} parent=11 // pred_check
          %p139 = pneg %p84
        $region18: #{tpu_custom_call.1} parent=11 // pred_check_branch
          %141 = sbr.rel (%p139) target = $region20
        $region19: #{tpu_custom_call.1} parent=11 // pred_region
          _
        $region20: #{tpu_custom_call.1} parent=11 // pred_fallthru
          _
      $region12: #{tpu_custom_call.1} parent=5 // pred_fallthru
        _
      %p142 = scmp.lt.s32.totalorder %s16, 8
      // Predicated region
      $region21: #{tpu_custom_call.1} parent=5 // pred_check
        %p143 = pneg %p142
      $region22: #{tpu_custom_call.1} parent=5 // pred_check_branch
        %145 = sbr.rel (%p143) target = $region24
      $region23: #{tpu_custom_call.1} parent=5 // pred_region
        // Predicated region
        $region25: #{tpu_custom_call.1} parent=23 // pred_check
          %p146 = pneg %p36
        $region26: #{tpu_custom_call.1} parent=23 // pred_check_branch
          %148 = sbr.rel (%p146) target = $region28
        $region27: #{tpu_custom_call.1} parent=23 // pred_region
          %s149 = sand.u32 %s26, 1
          %s150 = scalar_lea.sflag [#allocation3], %s149
          %s151 = sand.u32 %s26, 1
          %s152 = smul.addr %s151, 64
          %s153 = scalar_lea.vmem [#allocation2], %s152
          %s154 = smul.u32 8, %s16
          %156 = vsyncadd %s150, 0
          %s157 = smul.addr %s154, 8
          %s158 = scalar_lea.hbm %s0, %s157
          %s159 = sshll.u32 %s158, 4
          %s160 = int_to_ptr.hbm [resolvable:$true] %s159
          %s161 = sshll.u32 %s153, 4
          %s162 = int_to_ptr.vmem [resolvable:$true] %s161
          %167 = dma.hbm_to_vmem [thread:$0]  %s160, 1024, %s162, %s150, 128, 128, 8
        $region28: #{tpu_custom_call.1} parent=23 // pred_fallthru
          _
      $region24: #{tpu_custom_call.1} parent=5 // pred_fallthru
        _
      %p168 = scmp.le.s32.totalorder 1, %s16
      %p169 = scmp.lt.s32.totalorder %s16, 9
      %p170 = pnand %p168, %p169
      %p171 = pneg %p170
      // Predicated region
      $region29: #{tpu_custom_call.1} parent=5 // pred_check
        _
      $region30: #{tpu_custom_call.1} parent=5 // pred_check_branch
        %173 = sbr.rel (%p170) target = $region32
      $region31: #{tpu_custom_call.1} parent=5 // pred_region
        %s174 = ssub.s32 %s16, 1
        %s175 = sand.u32 %s29, 1
        %s176 = scalar_lea.sflag [#allocation3], %s175
        %s177 = sand.u32 %s29, 1
        %s178 = smul.addr %s177, 64
        %s179 = scalar_lea.vmem [#allocation2], %s178
        // Predicated region
        $region33: #{tpu_custom_call.1} parent=31 // pred_check
          %p180 = pneg %p42
        $region34: #{tpu_custom_call.1} parent=31 // pred_check_branch
          %182 = sbr.rel (%p180) target = $region36
        $region35: #{tpu_custom_call.1} parent=31 // pred_region
          %184 = dma.done %s176, 1024
        $region36: #{tpu_custom_call.1} parent=31 // pred_fallthru
          _
        // Predicated region
        $region37: #{tpu_custom_call.1} parent=31 // pred_check
          %p185 = pneg %p63
        $region38: #{tpu_custom_call.1} parent=31 // pred_check_branch
          %187 = sbr.rel (%p185) target = $region40
        $region39: #{tpu_custom_call.1} parent=31 // pred_region
          %189 = dma.done [#allocation6], 1024
        $region40: #{tpu_custom_call.1} parent=31 // pred_fallthru
          _
        %s190 = sand.u32 %s29, 1
        %s191 = scalar_lea.sflag [#allocation3], %s190
        %s192 = sand.u32 %s29, 1
        %s193 = smul.addr %s192, 64
        %s194 = scalar_lea.vmem [#allocation2], %s193
        %p195 = pneg %p42
        %p196 = pneg %p39
        %p197 = pneg %p63
        %p198 = pneg %p60
        %p199 = pneg %p84
        %p200 = pneg %p81
        %p201 = pneg %p110
        %p202 = pneg %p107
        %s203 = sand.u32 %s97, 1
        %s204 = scalar_lea.sflag [#allocation4], %s203
        %s205 = sand.u32 %s97, 1
        %s206 = smul.addr %s205, 64
        %s207 = scalar_lea.vmem [#allocation7], %s206
        %s208 = smul.u32 8, %s21
        %s209 = smul.u32 8, %s21
        %v210 = vld [vmem:[%s179] sm:$0xff]
        %v211 = vld [vmem:[%s179 + $0x8] sm:$0xff]
        %v212 = vld [vmem:[%s179 + $0x10] sm:$0xff]
        %v213 = vld [vmem:[%s179 + $0x18] sm:$0xff]
        %v214 = vld [vmem:[%s179 + $0x20] sm:$0xff]
        %v215 = vld [vmem:[%s179 + $0x28] sm:$0xff]
        %v216 = vld [vmem:[%s179 + $0x30] sm:$0xff]
        %v217 = vld [vmem:[%s179 + $0x38] sm:$0xff]
        %218 = vadd.xlane.f32.xlu0 %v210
        %v219 = vpop.xlane.xlu0 %218
        %220 = vadd.xlane.f32.xlu0 %v211
        %v221 = vpop.xlane.xlu0 %220
        %222 = vadd.xlane.f32.xlu0 %v212
        %v223 = vpop.xlane.xlu0 %222
        %224 = vadd.xlane.f32.xlu0 %v213
        %v225 = vpop.xlane.xlu0 %224
        %226 = vadd.xlane.f32.xlu0 %v214
        %v227 = vpop.xlane.xlu0 %226
        %228 = vadd.xlane.f32.xlu0 %v215
        %v229 = vpop.xlane.xlu0 %228
        %230 = vadd.xlane.f32.xlu0 %v216
        %v231 = vpop.xlane.xlu0 %230
        %232 = vadd.xlane.f32.xlu0 %v217
        %v233 = vpop.xlane.xlu0 %232
        %v234 = vmul.f32 %v219, 0.0078125
        %v235 = vmul.f32 %v221, 0.0078125
        %v236 = vmul.f32 %v223, 0.0078125
        %v237 = vmul.f32 %v225, 0.0078125
        %v238 = vmul.f32 %v227, 0.0078125
        %v239 = vmul.f32 %v229, 0.0078125
        %v240 = vmul.f32 %v231, 0.0078125
        %v241 = vmul.f32 %v233, 0.0078125
        %v242 = vsub.f32 %v210, %v234
        %v243 = vsub.f32 %v211, %v235
        %v244 = vsub.f32 %v212, %v236
        %v245 = vsub.f32 %v213, %v237
        %v246 = vsub.f32 %v214, %v238
        %v247 = vsub.f32 %v215, %v239
        %v248 = vsub.f32 %v216, %v240
        %v249 = vsub.f32 %v217, %v241
        %v250 = vmul.f32 %v242, %v242
        %v251 = vmul.f32 %v243, %v243
        %v252 = vmul.f32 %v244, %v244
        %v253 = vmul.f32 %v245, %v245
        %v254 = vmul.f32 %v246, %v246
        %v255 = vmul.f32 %v247, %v247
        %v256 = vmul.f32 %v248, %v248
        %v257 = vmul.f32 %v249, %v249
        %258 = vadd.xlane.f32.xlu0 %v250
        %v259 = vpop.xlane.xlu0 %258
        %260 = vadd.xlane.f32.xlu0 %v251
        %v261 = vpop.xlane.xlu0 %260
        %262 = vadd.xlane.f32.xlu0 %v252
        %v263 = vpop.xlane.xlu0 %262
        %264 = vadd.xlane.f32.xlu0 %v253
        %v265 = vpop.xlane.xlu0 %264
        %266 = vadd.xlane.f32.xlu0 %v254
        %v267 = vpop.xlane.xlu0 %266
        %268 = vadd.xlane.f32.xlu0 %v255
        %v269 = vpop.xlane.xlu0 %268
        %270 = vadd.xlane.f32.xlu0 %v256
        %v271 = vpop.xlane.xlu0 %270
        %272 = vadd.xlane.f32.xlu0 %v257
        %v273 = vpop.xlane.xlu0 %272
        %v274 = vmul.f32 %v259, 0.0078125
        %v275 = vmul.f32 %v261, 0.0078125
        %v276 = vmul.f32 %v263, 0.0078125
        %v277 = vmul.f32 %v265, 0.0078125
        %v278 = vmul.f32 %v267, 0.0078125
        %v279 = vmul.f32 %v269, 0.0078125
        %v280 = vmul.f32 %v271, 0.0078125
        %v281 = vmul.f32 %v273, 0.0078125
        %v282 = vadd.f32 %v274, 1e-05
        %v283 = vadd.f32 %v275, 1e-05
        %v284 = vadd.f32 %v276, 1e-05
        %v285 = vadd.f32 %v277, 1e-05
        %v286 = vadd.f32 %v278, 1e-05
        %v287 = vadd.f32 %v279, 1e-05
        %v288 = vadd.f32 %v280, 1e-05
        %v289 = vadd.f32 %v281, 1e-05
        %v290 = vrsqrt.pop %v282
        %v291 = vmul.f32 %v290, %v282
        %v292 = vmul.f32 %v291, %v290
        %v293 = vmul.f32 0.5, %v292
        %v294 = vsub.f32 1.5, %v293
        %v295 = vmul.f32 %v290, %v294
        %vm296 = vweird.f32 %v282
        %vm297 = vweird.f32 %v290
        %vm298 = vmor %vm296, %vm297
        %v299 = vsel %vm298, %v290, %v295
        %v300 = vrsqrt.pop %v283
        %v301 = vmul.f32 %v300, %v283
        %v302 = vmul.f32 %v301, %v300
        %v303 = vmul.f32 0.5, %v302
        %v304 = vsub.f32 1.5, %v303
        %v305 = vmul.f32 %v300, %v304
        %vm306 = vweird.f32 %v283
        %vm307 = vweird.f32 %v300
        %vm308 = vmor %vm306, %vm307
        %v309 = vsel %vm308, %v300, %v305
        %v310 = vrsqrt.pop %v284
        %v311 = vmul.f32 %v310, %v284
        %v312 = vmul.f32 %v311, %v310
        %v313 = vmul.f32 0.5, %v312
        %v314 = vsub.f32 1.5, %v313
        %v315 = vmul.f32 %v310, %v314
        %vm316 = vweird.f32 %v284
        %vm317 = vweird.f32 %v310
        %vm318 = vmor %vm316, %vm317
        %v319 = vsel %vm318, %v310, %v315
        %v320 = vrsqrt.pop %v285
        %v321 = vmul.f32 %v320, %v285
        %v322 = vmul.f32 %v321, %v320
        %v323 = vmul.f32 0.5, %v322
        %v324 = vsub.f32 1.5, %v323
        %v325 = vmul.f32 %v320, %v324
        %vm326 = vweird.f32 %v285
        %vm327 = vweird.f32 %v320
        %vm328 = vmor %vm326, %vm327
        %v329 = vsel %vm328, %v320, %v325
        %v330 = vrsqrt.pop %v286
        %v331 = vmul.f32 %v330, %v286
        %v332 = vmul.f32 %v331, %v330
        %v333 = vmul.f32 0.5, %v332
        %v334 = vsub.f32 1.5, %v333
        %v335 = vmul.f32 %v330, %v334
        %vm336 = vweird.f32 %v286
        %vm337 = vweird.f32 %v330
        %vm338 = vmor %vm336, %vm337
        %v339 = vsel %vm338, %v330, %v335
        %v340 = vrsqrt.pop %v287
        %v341 = vmul.f32 %v340, %v287
        %v342 = vmul.f32 %v341, %v340
        %v343 = vmul.f32 0.5, %v342
        %v344 = vsub.f32 1.5, %v343
        %v345 = vmul.f32 %v340, %v344
        %vm346 = vweird.f32 %v287
        %vm347 = vweird.f32 %v340
        %vm348 = vmor %vm346, %vm347
        %v349 = vsel %vm348, %v340, %v345
        %v350 = vrsqrt.pop %v288
        %v351 = vmul.f32 %v350, %v288
        %v352 = vmul.f32 %v351, %v350
        %v353 = vmul.f32 0.5, %v352
        %v354 = vsub.f32 1.5, %v353
        %v355 = vmul.f32 %v350, %v354
        %vm356 = vweird.f32 %v288
        %vm357 = vweird.f32 %v350
        %vm358 = vmor %vm356, %vm357
        %v359 = vsel %vm358, %v350, %v355
        %v360 = vrsqrt.pop %v289
        %v361 = vmul.f32 %v360, %v289
        %v362 = vmul.f32 %v361, %v360
        %v363 = vmul.f32 0.5, %v362
        %v364 = vsub.f32 1.5, %v363
        %v365 = vmul.f32 %v360, %v364
        %vm366 = vweird.f32 %v289
        %vm367 = vweird.f32 %v360
        %vm368 = vmor %vm366, %vm367
        %v369 = vsel %vm368, %v360, %v365
        %v370 = vmul.f32 %v242, %v299
        %v371 = vmul.f32 %v243, %v309
        %v372 = vmul.f32 %v244, %v319
        %v373 = vmul.f32 %v245, %v329
        %v374 = vmul.f32 %v246, %v339
        %v375 = vmul.f32 %v247, %v349
        %v376 = vmul.f32 %v248, %v359
        %v377 = vmul.f32 %v249, %v369
        %v378 = vpack.c.bf16 %v371, %v370
        %v379 = vpack.c.bf16 %v373, %v372
        %v380 = vpack.c.bf16 %v375, %v374
        %v381 = vpack.c.bf16 %v377, %v376
        %v382 = vld [vmem:[#allocation5] sm:$0xf]
        %v383 = vld [vmem:[#allocation5 + $0x4] sm:$0xf]
        %v384 = vld [vmem:[#allocation5 + $0x8] sm:$0xf]
        %v385 = vld [vmem:[#allocation5 + $0xc] sm:$0xf]
        %v386 = vld [vmem:[#allocation5 + $0x10] sm:$0xf]
        %v387 = vld [vmem:[#allocation5 + $0x14] sm:$0xf]
        %v388 = vld [vmem:[#allocation5 + $0x18] sm:$0xf]
        %v389 = vld [vmem:[#allocation5 + $0x1c] sm:$0xf]
        %v390 = vld [vmem:[#allocation5 + $0x20] sm:$0xf]
        %v391 = vld [vmem:[#allocation5 + $0x24] sm:$0xf]
        %v392 = vld [vmem:[#allocation5 + $0x28] sm:$0xf]
        %v393 = vld [vmem:[#allocation5 + $0x2c] sm:$0xf]
        %v394 = vld [vmem:[#allocation5 + $0x30] sm:$0xf]
        %v395 = vld [vmem:[#allocation5 + $0x34] sm:$0xf]
        %v396 = vld [vmem:[#allocation5 + $0x38] sm:$0xf]
        %v397 = vld [vmem:[#allocation5 + $0x3c] sm:$0xf]
        %v398 = vld [vmem:[%s2] sm:$0x1]
        %v400 = vperm.slane %v398, 0
        %v418 = vunpack.c.l.b16 %v382
        %v419 = vunpack.c.l.b16 %v383
        %v420 = vunpack.c.l.b16 %v384
        %v421 = vunpack.c.l.b16 %v385
        %v422 = vunpack.c.l.b16 %v386
        %v423 = vunpack.c.l.b16 %v387
        %v424 = vunpack.c.l.b16 %v388
        %v425 = vunpack.c.l.b16 %v389
        %v426 = vunpack.c.l.b16 %v390
        %v427 = vunpack.c.l.b16 %v391
        %v428 = vunpack.c.l.b16 %v392
        %v429 = vunpack.c.l.b16 %v393
        %v430 = vunpack.c.l.b16 %v394
        %v431 = vunpack.c.l.b16 %v395
        %v432 = vunpack.c.l.b16 %v396
        %v433 = vunpack.c.l.b16 %v397
        %v434 = vpack.c.b16 %v419, %v418
        %v435 = vpack.c.b16 %v421, %v420
        %v436 = vpack.c.b16 %v423, %v422
        %v437 = vpack.c.b16 %v425, %v424
        %v438 = vpack.c.b16 %v427, %v426
        %v439 = vpack.c.b16 %v429, %v428
        %v440 = vpack.c.b16 %v431, %v430
        %v441 = vpack.c.b16 %v433, %v432
        %450 = vmatpush.bf16.msra.mxu0 %v441
        %451 = vmatpush.bf16.msra.mxu0 %v440
        %452 = vmatpush.bf16.msra.mxu0 %v439
        %453 = vmatpush.bf16.msra.mxu0 %v438
        %454 = vmatpush.bf16.msra.mxu0 %v437
        %455 = vmatpush.bf16.msra.mxu0 %v436
        %456 = vmatpush.bf16.msra.mxu0 %v435
        %457 = vmatpush.bf16.msra.mxu0 %v434
        %458 = vmatmul.bf16.gmra.mxu0 %v378
        %v459 = vpop.f32.mrf.mxu0
        %v460 = vadd.f32 %v400, %v459
        %v461 = vpop.f32.mrf.mxu0
        %v462 = vadd.f32 %v400, %v461
        %463 = vmatmul.bf16.gmra.mxu0 %v379
        %v464 = vpop.f32.mrf.mxu0
        %v465 = vadd.f32 %v400, %v464
        %v466 = vpop.f32.mrf.mxu0
        %v467 = vadd.f32 %v400, %v466
        %468 = vmatmul.bf16.gmra.mxu0 %v380
        %v469 = vpop.f32.mrf.mxu0
        %v470 = vadd.f32 %v400, %v469
        %v471 = vpop.f32.mrf.mxu0
        %v472 = vadd.f32 %v400, %v471
        %473 = vmatmul.bf16.gmra.mxu0 %v381
        %v474 = vpop.f32.mrf.mxu0
        %v475 = vadd.f32 %v400, %v474
        %v476 = vpop.f32.mrf.mxu0
        %v477 = vadd.f32 %v400, %v476
        %478 = vdwg.mxu0
        %479 = vst [vmem:[%s207] sm:$0xff] %v460
        %480 = vst [vmem:[%s207 + $0x8] sm:$0xff] %v462
        %481 = vst [vmem:[%s207 + $0x10] sm:$0xff] %v465
        %482 = vst [vmem:[%s207 + $0x18] sm:$0xff] %v467
        %483 = vst [vmem:[%s207 + $0x20] sm:$0xff] %v470
        %484 = vst [vmem:[%s207 + $0x28] sm:$0xff] %v472
        %485 = vst [vmem:[%s207 + $0x30] sm:$0xff] %v475
        %486 = vst [vmem:[%s207 + $0x38] sm:$0xff] %v477
        %s487 = sand.u32 %s97, 1
        %s488 = scalar_lea.sflag [#allocation4], %s487
        %s489 = sand.u32 %s97, 1
        %s490 = smul.addr %s489, 64
        %s491 = scalar_lea.vmem [#allocation7], %s490
        // Predicated region
        $region41: #{tpu_custom_call.1} parent=31 // pred_check
          %p492 = pneg %p107
        $region42: #{tpu_custom_call.1} parent=31 // pred_check_branch
          %494 = sbr.rel (%p492) target = $region44
        $region43: #{tpu_custom_call.1} parent=31 // pred_region
          %s495 = smul.u32 8, %s21
          %497 = vsyncadd %s488, 0
          %s498 = smul.addr %s495, 8
          %s499 = scalar_lea.hbm %s3, %s498
          %s500 = sshll.u32 %s491, 4
          %s501 = int_to_ptr.vmem [resolvable:$true] %s500
          %s502 = sshll.u32 %s499, 4
          %s503 = int_to_ptr.hbm [resolvable:$true] %s502
          %508 = dma.vmem_to_hbm [thread:$0]  %s501, 1024, %s503, %s488, 128, 128, 8
        $region44: #{tpu_custom_call.1} parent=31 // pred_fallthru
          _
      $region32: #{tpu_custom_call.1} parent=5 // pred_fallthru
        _
      %p509 = scmp.le.s32.totalorder 2, %s16
      // Predicated region
      $region45: #{tpu_custom_call.1} parent=5 // pred_check
        %p510 = pneg %p509
      $region46: #{tpu_custom_call.1} parent=5 // pred_check_branch
        %512 = sbr.rel (%p510) target = $region48
      $region47: #{tpu_custom_call.1} parent=5 // pred_region
        %s513 = ssub.s32 %s16, 2
        // Predicated region
        $region49: #{tpu_custom_call.1} parent=47 // pred_check
          %p514 = pneg %p113
        $region50: #{tpu_custom_call.1} parent=47 // pred_check_branch
          %516 = sbr.rel (%p514) target = $region52
        $region51: #{tpu_custom_call.1} parent=47 // pred_region
          %s517 = sand.u32 %s98, 1
          %s518 = scalar_lea.sflag [#allocation4], %s517
          %s519 = sand.u32 %s98, 1
          %s520 = smul.addr %s519, 64
          %s521 = scalar_lea.vmem [#allocation7], %s520
          %523 = dma.done %s518, 1024
        $region52: #{tpu_custom_call.1} parent=47 // pred_fallthru
          _
      $region48: #{tpu_custom_call.1} parent=5 // pred_fallthru
        _
    $region6: #{tpu_custom_call.1} parent=1 // loop_footer
      %s20 = sadd.s32 1, %s16
    $region7: #{tpu_custom_call.1} parent=1 // loop_footer_branch
      %15 = sbr.rel target = $region3
    $region8: #{tpu_custom_call.1} parent=1 // loop_exit
      _
    %524 = vsyncpa [#allocation3], 1
    %s525 = scalar_lea.sflag [#allocation3], 1
    %526 = vsyncpa %s525, 1
    %527 = vsyncpa [#allocation6], 1
    %528 = vsyncpa [#allocation4], 1
    %s529 = scalar_lea.sflag [#allocation4], 1
    %530 = vsyncpa %s529, 1

</llo_original>
